<compile_context>
chip_gen: v5e
topology: v5e:2x2
jax: 0.10.0
libtpu: 0.0.40
codegen_flags: <defaults>
</compile_context>

<pallas_src>
import jax
import jax.numpy as jnp
from jax.experimental import pallas as pl
from jax.experimental.pallas import tpu as pltpu


def _round_up(n, m):
    return ((n + m - 1) // m) * m


def _mlp_kernel(x_ref, w1_ref, b1_ref, w2_ref, b2_ref, w3r_ref, b3_ref, o_ref):
    # Layer 1: bf16 x @ bf16 W1 on the MXU, f32 accumulator, +bias, ReLU.
    # (Dropout(0.2) is identity in eval mode.)
    h1 = jnp.dot(x_ref[...], w1_ref[...], preferred_element_type=jnp.float32)
    h1 = jnp.maximum(h1 + b1_ref[...], 0.0)

    # Layer 2: f32 matmul on VMEM-resident weights (K, N are tiny; MXU is idle
    # anyway since the kernel is HBM-bandwidth bound), +bias, ReLU.
    h2 = jnp.dot(h1, w2_ref[...], preferred_element_type=jnp.float32)
    h2 = jnp.maximum(h2 + b2_ref[...], 0.0)

    # Layer 3 (out_features == 1): VPU multiply + cross-lane sum instead of a
    # degenerate single-column MXU matmul.
    logits = jnp.sum(h2 * w3r_ref[...], axis=-1, keepdims=True) + b3_ref[...]

    o_ref[...] = jax.nn.sigmoid(logits).astype(o_ref.dtype)


def recommendation_forward(x, params, *, tile_b=4096):
    """Fused MLP forward. x: (B, input_dim) f32. Returns (B, 1) f32.

    Batch is tiled along a 1-D grid; weights stay VMEM-resident across steps.
    tile_b defaults to 4096 rows (x tile is only a few hundred KiB even
    double-buffered, comfortably inside v7x's 32 MiB scoped VMEM).
    """
    w1, b1, w2, b2, w3, b3 = params
    B, input_dim = x.shape
    emb = w1.shape[1]
    hid2 = w2.shape[1]

    # Dominant HBM stream (x) and the matching W1 operand in bf16 for the MXU.
    x_bf16 = x.astype(jnp.bfloat16)
    w1_bf16 = w1.astype(jnp.bfloat16)
    # Layer-3 weight as a (1, hid2) row for the VPU reduction; bias as (1, 1).
    w3_row = w3.reshape(1, hid2).astype(jnp.float32)
    b3_2d = b3.reshape(1, 1).astype(jnp.float32)

    # Batch tiling: tile must be a multiple of 8 (sublane); pad B up to a
    # multiple of tile_b so the last grid step never reads/writes OOB.
    tile_b = max(8, min(tile_b, _round_up(B, 8)))
    b_pad = _round_up(B, tile_b)
    if b_pad != B:
        x_bf16 = jnp.pad(x_bf16, ((0, b_pad - B), (0, 0)))
    grid = (pl.cdiv(b_pad, tile_b),)

    # x / out move with the grid; weights & biases use a constant index_map so
    # they are fetched once and stay resident in VMEM.
    x_spec = pl.BlockSpec((tile_b, input_dim), lambda i: (i, 0))
    w1_spec = pl.BlockSpec((input_dim, emb), lambda i: (0, 0))
    b1_spec = pl.BlockSpec((1, emb), lambda i: (0, 0))
    w2_spec = pl.BlockSpec((emb, hid2), lambda i: (0, 0))
    b2_spec = pl.BlockSpec((1, hid2), lambda i: (0, 0))
    w3_spec = pl.BlockSpec((1, hid2), lambda i: (0, 0))
    b3_spec = pl.BlockSpec((1, 1), lambda i: (0, 0))
    out_spec = pl.BlockSpec((tile_b, 1), lambda i: (i, 0))

    out = pl.pallas_call(
        _mlp_kernel,
        out_shape=jax.ShapeDtypeStruct((b_pad, 1), jnp.float32),
        grid=grid,
        in_specs=[x_spec, w1_spec, b1_spec, w2_spec, b2_spec, w3_spec, b3_spec],
        out_specs=out_spec,
        compiler_params=pltpu.CompilerParams(
            dimension_semantics=("parallel",),
            vmem_limit_bytes=32 * 1024 * 1024,
        ),
    )(x_bf16, w1_bf16, b1, w2, b2, w3_row, b3_2d)

    return out[:B] if b_pad != B else out


def init_params(key, input_dim, embedding_dim):
    """Deterministic init mimicking PyTorch Linear default U(-1/sqrt(fan_in), +).

    Weights are stored transposed vs. PyTorch, i.e. (in_features, out_features),
    so the kernel computes x @ W + b directly.
    """
    hid2 = embedding_dim // 2
    keys = jax.random.split(key, 6)

    def lin_init(kw, kb, fan_in, fan_out):
        bound = 1.0 / jnp.sqrt(fan_in)
        w = jax.random.uniform(kw, (fan_in, fan_out), jnp.float32, -bound, bound)
        b = jax.random.uniform(kb, (1, fan_out), jnp.float32, -bound, bound)
        return w, b

    w1, b1 = lin_init(keys[0], keys[1], input_dim, embedding_dim)
    w2, b2 = lin_init(keys[2], keys[3], embedding_dim, hid2)
    w3, b3 = lin_init(keys[4], keys[5], hid2, 1)
    return (w1, b1, w2, b2, w3, b3)


def reference_forward(x, params):
    """Pure-JAX reference mirroring the kernel's numerics (bf16 x / W1 stream)."""
    w1, b1, w2, b2, w3, b3 = params
    xh = x.astype(jnp.bfloat16).astype(jnp.float32)
    w1h = w1.astype(jnp.bfloat16).astype(jnp.float32)
    h1 = jnp.maximum(xh @ w1h + b1, 0.0)
    h2 = jnp.maximum(h1 @ w2 + b2, 0.0)
    return jax.nn.sigmoid(h2 @ w3 + b3.reshape(1, 1))


if __name__ == "__main__":
    key = jax.random.PRNGKey(0)
    k_x, k_p = jax.random.split(key)

    batch = 20            # deliberately not a multiple of the tile to exercise padding
    input_dim = 32
    embedding_dim = 32

    x = jax.random.normal(k_x, (batch, input_dim), jnp.float32)
    params = init_params(k_p, input_dim, embedding_dim)

    # Small tile so the tiny test batch still spans multiple grid steps
    # (production would use the default tile_b=4096).
    out = recommendation_forward(x, params, tile_b=8)
    out = jax.block_until_ready(out)

    ref = reference_forward(x, params)
    assert out.shape == (batch, 1), out.shape
    assert jnp.allclose(out, ref, atol=1e-4, rtol=1e-4), "mismatch vs reference"

    print("KERNEL_OK")
</pallas_src>

<mosaic_0001>
module attributes {stable_mosaic.version = 11 : i64} {
  func.func @_mlp_kernel(%arg0: i32, %arg1: memref<8x32xbf16, #tpu.memory_space<vmem>>, %arg2: memref<32x32xbf16, #tpu.memory_space<vmem>>, %arg3: memref<1x32xf32, #tpu.memory_space<vmem>>, %arg4: memref<32x16xf32, #tpu.memory_space<vmem>>, %arg5: memref<1x16xf32, #tpu.memory_space<vmem>>, %arg6: memref<1x16xf32, #tpu.memory_space<vmem>>, %arg7: memref<1x1xf32, #tpu.memory_space<vmem>>, %arg8: memref<8x1xf32, #tpu.memory_space<vmem>>) attributes {dimension_semantics = [#tpu.dimension_semantics<parallel>], iteration_bounds = array<i64: 3>, scalar_prefetch = 0 : i64, scratch_operands = 0 : i64, tpu.core_type = #tpu.core_type<tc>, window_params = [{transform_indices = @transform_0, window_bounds = array<i64: 8, 32>}, {pipeline_mode = #tpu.pipeline_mode<synchronous>, transform_indices = @transform_1, window_bounds = array<i64: 32, 32>}, {pipeline_mode = #tpu.pipeline_mode<synchronous>, transform_indices = @transform_2, window_bounds = array<i64: 1, 32>}, {pipeline_mode = #tpu.pipeline_mode<synchronous>, transform_indices = @transform_3, window_bounds = array<i64: 32, 16>}, {pipeline_mode = #tpu.pipeline_mode<synchronous>, transform_indices = @transform_4, window_bounds = array<i64: 1, 16>}, {pipeline_mode = #tpu.pipeline_mode<synchronous>, transform_indices = @transform_5, window_bounds = array<i64: 1, 16>}, {pipeline_mode = #tpu.pipeline_mode<synchronous>, transform_indices = @transform_6, window_bounds = array<i64: 1, 1>}, {transform_indices = @transform_7, window_bounds = array<i64: 8, 1>}]} {
    %c0 = arith.constant 0 : index
    %c0_0 = arith.constant 0 : index
    %0 = vector.load %arg1[%c0, %c0_0] : memref<8x32xbf16, #tpu.memory_space<vmem>>, vector<8x32xbf16>
    %c0_1 = arith.constant 0 : index
    %c0_2 = arith.constant 0 : index
    %1 = vector.load %arg2[%c0_1, %c0_2] : memref<32x32xbf16, #tpu.memory_space<vmem>>, vector<32x32xbf16>
    %cst = arith.constant dense<0.000000e+00> : vector<8x32xf32>
    %2 = tpu.matmul %0, %1, %cst {dimension_numbers = #tpu.dot_dimension_numbers<[1], [0], [0], [1], [0, 0, 1, 1], [], []>} : vector<8x32xbf16>, vector<32x32xbf16>, vector<8x32xf32> -> vector<8x32xf32>
    %c0_3 = arith.constant 0 : index
    %c0_4 = arith.constant 0 : index
    %3 = vector.load %arg3[%c0_3, %c0_4] : memref<1x32xf32, #tpu.memory_space<vmem>>, vector<1x32xf32>
    %4 = vector.broadcast %3 : vector<1x32xf32> to vector<8x32xf32>
    %5 = arith.addf %2, %4 : vector<8x32xf32>
    %cst_5 = arith.constant 0.000000e+00 : f32
    %6 = vector.broadcast %cst_5 : f32 to vector<8x32xf32>
    %7 = arith.maximumf %5, %6 : vector<8x32xf32>
    %c0_6 = arith.constant 0 : index
    %c0_7 = arith.constant 0 : index
    %8 = vector.load %arg4[%c0_6, %c0_7] : memref<32x16xf32, #tpu.memory_space<vmem>>, vector<32x16xf32>
    %cst_8 = arith.constant dense<0.000000e+00> : vector<8x16xf32>
    %9 = tpu.matmul %7, %8, %cst_8 {dimension_numbers = #tpu.dot_dimension_numbers<[1], [0], [0], [1], [0, 0, 1, 1], [], []>} : vector<8x32xf32>, vector<32x16xf32>, vector<8x16xf32> -> vector<8x16xf32>
    %c0_9 = arith.constant 0 : index
    %c0_10 = arith.constant 0 : index
    %10 = vector.load %arg5[%c0_9, %c0_10] : memref<1x16xf32, #tpu.memory_space<vmem>>, vector<1x16xf32>
    %11 = vector.broadcast %10 : vector<1x16xf32> to vector<8x16xf32>
    %12 = arith.addf %9, %11 : vector<8x16xf32>
    %cst_11 = arith.constant 0.000000e+00 : f32
    %13 = vector.broadcast %cst_11 : f32 to vector<8x16xf32>
    %14 = arith.maximumf %12, %13 : vector<8x16xf32>
    %c0_12 = arith.constant 0 : index
    %c0_13 = arith.constant 0 : index
    %15 = vector.load %arg6[%c0_12, %c0_13] : memref<1x16xf32, #tpu.memory_space<vmem>>, vector<1x16xf32>
    %16 = vector.broadcast %15 : vector<1x16xf32> to vector<8x16xf32>
    %17 = arith.mulf %14, %16 : vector<8x16xf32>
    %cst_14 = arith.constant dense<0.000000e+00> : vector<8xf32>
    %18 = vector.multi_reduction <add>, %17, %cst_14 [1] : vector<8x16xf32> to vector<8xf32>
    %19 = vector.shape_cast %18 : vector<8xf32> to vector<8x1xf32>
    %c0_15 = arith.constant 0 : index
    %c0_16 = arith.constant 0 : index
    %20 = vector.load %arg7[%c0_15, %c0_16] : memref<1x1xf32, #tpu.memory_space<vmem>>, vector<1x1xf32>
    %21 = vector.broadcast %20 : vector<1x1xf32> to vector<8x1xf32>
    %22 = arith.addf %19, %21 : vector<8x1xf32>
    %23 = arith.negf %22 : vector<8x1xf32>
    %24 = math.exp %23 : vector<8x1xf32>
    %cst_17 = arith.constant 1.000000e+00 : f32
    %25 = vector.broadcast %cst_17 : f32 to vector<8x1xf32>
    %26 = arith.addf %25, %24 : vector<8x1xf32>
    %27 = arith.divf %25, %26 : vector<8x1xf32>
    %c0_18 = arith.constant 0 : index
    %c0_19 = arith.constant 0 : index
    %28 = vector.load %arg8[%c0_18, %c0_19] : memref<8x1xf32, #tpu.memory_space<vmem>>, vector<8x1xf32>
    tpu.vector_store %arg8[%c0_18, %c0_19], %27 {strides = array<i32>} : memref<8x1xf32, #tpu.memory_space<vmem>>, vector<8x1xf32>,
    return
  }
  func.func @transform_0(%arg0: i32) -> (i32, i32) {
    %c0_i32 = arith.constant 0 : i32
    %c0_i32_0 = arith.constant 0 : i32
    return %arg0, %c0_i32 : i32, i32
  }
  func.func @transform_1(%arg0: i32) -> (i32, i32) {
    %c0_i32 = arith.constant 0 : i32
    %c0_i32_0 = arith.constant 0 : i32
    %c0_i32_1 = arith.constant 0 : i32
    return %c0_i32, %c0_i32_0 : i32, i32
  }
  func.func @transform_2(%arg0: i32) -> (i32, i32) {
    %c0_i32 = arith.constant 0 : i32
    %c0_i32_0 = arith.constant 0 : i32
    %c0_i32_1 = arith.constant 0 : i32
    return %c0_i32, %c0_i32_0 : i32, i32
  }
  func.func @transform_3(%arg0: i32) -> (i32, i32) {
    %c0_i32 = arith.constant 0 : i32
    %c0_i32_0 = arith.constant 0 : i32
    %c0_i32_1 = arith.constant 0 : i32
    return %c0_i32, %c0_i32_0 : i32, i32
  }
  func.func @transform_4(%arg0: i32) -> (i32, i32) {
    %c0_i32 = arith.constant 0 : i32
    %c0_i32_0 = arith.constant 0 : i32
    %c0_i32_1 = arith.constant 0 : i32
    return %c0_i32, %c0_i32_0 : i32, i32
  }
  func.func @transform_5(%arg0: i32) -> (i32, i32) {
    %c0_i32 = arith.constant 0 : i32
    %c0_i32_0 = arith.constant 0 : i32
    %c0_i32_1 = arith.constant 0 : i32
    return %c0_i32, %c0_i32_0 : i32, i32
  }
  func.func @transform_6(%arg0: i32) -> (i32, i32) {
    %c0_i32 = arith.constant 0 : i32
    %c0_i32_0 = arith.constant 0 : i32
    %c0_i32_1 = arith.constant 0 : i32
    return %c0_i32, %c0_i32_0 : i32, i32
  }
  func.func @transform_7(%arg0: i32) -> (i32, i32) {
    %c0_i32 = arith.constant 0 : i32
    %c0_i32_0 = arith.constant 0 : i32
    return %arg0, %c0_i32 : i32, i32
  }
}

</mosaic_0001>

<llo_original>
// kernel: tpu_custom_call.1
$region0: #{tpu_custom_call.1}
  #allocation0 [shape = 'u32[]', space=smem, size = 0x4, offset = 0x4, fixed_abs, tag = 'smem constant byte address 0x4 - core index']
  #allocation1 [shape = 'u32[72,128]{1,0:T(1,128)}', space=vmem, size = 0x9000, scoped, tag = 'internal scratch']
  #allocation2 [shape = 'f32[1,1]{1,0:T(1,128)S(1)}', space=vmem, size = 0x200, scoped, tag = 'scoped memory for tpu_custom_call.1']
  %s0 = inlined_call_operand.vmem [shape: bf16[24,32], index: 0, kind: input, shape index: {}]
  %s1 = inlined_call_operand.vmem [shape: bf16[32,32], index: 1, kind: input, shape index: {}]
  %s2 = inlined_call_operand.vmem [shape: f32[1,32], index: 2, kind: input, shape index: {}]
  %s3 = inlined_call_operand.vmem [shape: f32[32,16], index: 3, kind: input, shape index: {}]
  %s4 = inlined_call_operand.vmem [shape: f32[1,16], index: 4, kind: input, shape index: {}]
  %s5 = inlined_call_operand.vmem [shape: f32[1,16], index: 5, kind: input, shape index: {}]
  %s6 = inlined_call_operand.<no memory space> [shape: f32[1,1], index: 6, kind: input, shape index: {}]
  %s7 = inlined_call_operand.vmem [shape: f32[24,1], index: 7, kind: output, shape index: {}]
  %s8 = sld [smem:[#allocation0]]
  $region61: #{tpu_custom_call.1} parent=0
    _
  %s10 = ssub.s32 1, %s8
  %s11 = scalar_select 0, %s10, %s8
  %v12 = vstv %s6
  %13 = vst [vmem:[#allocation2] sm:$0x1] %v12
  loop: start=0, step=1, limit=5
  $region2: #{tpu_custom_call.1} parent=0 // loop_pre_header
    _
  $region3: #{tpu_custom_call.1} parent=0 // loop_header
    %s15 = sphi 0, %s19
    %p16 = scmp.ge.s32.totalorder %s15, 5
    %s25 = sphi 0, %s27
    %s28 = sphi 0, %s25
    %s29 = sphi 0, %s28
    %s45 = sphi 0, %s29
    %s49 = sphi 0, %s49
    %s51 = sphi 0, %s49
    %s52 = sphi 0, %s51
    %s66 = sphi 0, %s52
    %s70 = sphi 0, %s70
    %s72 = sphi 0, %s70
    %s73 = sphi 0, %s72
    %s87 = sphi 0, %s73
    %s91 = sphi 0, %s91
    %s93 = sphi 0, %s91
    %s94 = sphi 0, %s93
    %s108 = sphi 0, %s94
    %s112 = sphi 0, %s112
    %s114 = sphi 0, %s112
    %s115 = sphi 0, %s114
    %s129 = sphi 0, %s115
    %s133 = sphi 0, %s133
    %s135 = sphi 0, %s133
    %s136 = sphi 0, %s135
    %s150 = sphi 0, %s136
    %s154 = sphi 0, %s154
    %s156 = sphi 0, %s154
    %s157 = sphi 0, %s156
    %s171 = sphi 0, %s157
    %s177 = sphi 0, %s179
    %s180 = sphi 0, %s177
    %s181 = sphi 0, %s180
    %s197 = sphi 0, %s181
  $region4: #{tpu_custom_call.1} parent=0 // loop_header_branch
    %18 = sbr.rel (%p16) target = $region8
  $region5: #{tpu_custom_call.1} parent=0 // loop_body
    %s20 = ssub.s32 %s15, 1
    %s21 = ssub.s32 %s15, 2
    %s22 = sadd.s32 %s15, 1
    %s23 = ssub.s32 %s15, %s22
    %p24 = scmp.eq.s32.totalorder %s23, 0
    %s26 = sadd.s32 %s25, 1
    %s27 = scalar_select %p24, %s25, %s26
    %p30 = pneg %p24
    %p31 = scmp.eq.s32.totalorder %s15, 2
    %p32 = por %p30, %p31
    %p33 = scmp.ne.s32.totalorder %s25, %s28
    %p34 = scmp.eq.s32.totalorder %s15, 0
    %p35 = por %p33, %p34
    %p36 = scmp.ne.s32.totalorder %s25, %s28
    %p37 = scmp.eq.s32.totalorder %s20, 2
    %p38 = por %p36, %p37
    %p39 = scmp.ne.s32.totalorder %s28, %s29
    %p40 = scmp.eq.s32.totalorder %s20, 0
    %p41 = por %p39, %p40
    %p42 = scmp.ne.s32.totalorder %s28, %s29
    %p43 = scmp.eq.s32.totalorder %s21, 2
    %p44 = por %p42, %p43
    %p46 = scmp.ne.s32.totalorder %s29, %s45
    %p47 = scmp.eq.s32.totalorder %s21, 0
    %p48 = por %p46, %p47
    %s50 = sadd.s32 %s49, 1
    %p53 = scmp.eq.s32.totalorder %s15, 2
    %p54 = scmp.ne.s32.totalorder %s49, %s51
    %p55 = scmp.eq.s32.totalorder %s15, 0
    %p56 = por %p54, %p55
    %p57 = scmp.ne.s32.totalorder %s49, %s51
    %p58 = scmp.eq.s32.totalorder %s20, 2
    %p59 = por %p57, %p58
    %p60 = scmp.ne.s32.totalorder %s51, %s52
    %p61 = scmp.eq.s32.totalorder %s20, 0
    %p62 = por %p60, %p61
    %p63 = scmp.ne.s32.totalorder %s51, %s52
    %p64 = scmp.eq.s32.totalorder %s21, 2
    %p65 = por %p63, %p64
    %p67 = scmp.ne.s32.totalorder %s52, %s66
    %p68 = scmp.eq.s32.totalorder %s21, 0
    %p69 = por %p67, %p68
    %s71 = sadd.s32 %s70, 1
    %p74 = scmp.eq.s32.totalorder %s15, 2
    %p75 = scmp.ne.s32.totalorder %s70, %s72
    %p76 = scmp.eq.s32.totalorder %s15, 0
    %p77 = por %p75, %p76
    %p78 = scmp.ne.s32.totalorder %s70, %s72
    %p79 = scmp.eq.s32.totalorder %s20, 2
    %p80 = por %p78, %p79
    %p81 = scmp.ne.s32.totalorder %s72, %s73
    %p82 = scmp.eq.s32.totalorder %s20, 0
    %p83 = por %p81, %p82
    %p84 = scmp.ne.s32.totalorder %s72, %s73
    %p85 = scmp.eq.s32.totalorder %s21, 2
    %p86 = por %p84, %p85
    %p88 = scmp.ne.s32.totalorder %s73, %s87
    %p89 = scmp.eq.s32.totalorder %s21, 0
    %p90 = por %p88, %p89
    %s92 = sadd.s32 %s91, 1
    %p95 = scmp.eq.s32.totalorder %s15, 2
    %p96 = scmp.ne.s32.totalorder %s91, %s93
    %p97 = scmp.eq.s32.totalorder %s15, 0
    %p98 = por %p96, %p97
    %p99 = scmp.ne.s32.totalorder %s91, %s93
    %p100 = scmp.eq.s32.totalorder %s20, 2
    %p101 = por %p99, %p100
    %p102 = scmp.ne.s32.totalorder %s93, %s94
    %p103 = scmp.eq.s32.totalorder %s20, 0
    %p104 = por %p102, %p103
    %p105 = scmp.ne.s32.totalorder %s93, %s94
    %p106 = scmp.eq.s32.totalorder %s21, 2
    %p107 = por %p105, %p106
    %p109 = scmp.ne.s32.totalorder %s94, %s108
    %p110 = scmp.eq.s32.totalorder %s21, 0
    %p111 = por %p109, %p110
    %s113 = sadd.s32 %s112, 1
    %p116 = scmp.eq.s32.totalorder %s15, 2
    %p117 = scmp.ne.s32.totalorder %s112, %s114
    %p118 = scmp.eq.s32.totalorder %s15, 0
    %p119 = por %p117, %p118
    %p120 = scmp.ne.s32.totalorder %s112, %s114
    %p121 = scmp.eq.s32.totalorder %s20, 2
    %p122 = por %p120, %p121
    %p123 = scmp.ne.s32.totalorder %s114, %s115
    %p124 = scmp.eq.s32.totalorder %s20, 0
    %p125 = por %p123, %p124
    %p126 = scmp.ne.s32.totalorder %s114, %s115
    %p127 = scmp.eq.s32.totalorder %s21, 2
    %p128 = por %p126, %p127
    %p130 = scmp.ne.s32.totalorder %s115, %s129
    %p131 = scmp.eq.s32.totalorder %s21, 0
    %p132 = por %p130, %p131
    %s134 = sadd.s32 %s133, 1
    %p137 = scmp.eq.s32.totalorder %s15, 2
    %p138 = scmp.ne.s32.totalorder %s133, %s135
    %p139 = scmp.eq.s32.totalorder %s15, 0
    %p140 = por %p138, %p139
    %p141 = scmp.ne.s32.totalorder %s133, %s135
    %p142 = scmp.eq.s32.totalorder %s20, 2
    %p143 = por %p141, %p142
    %p144 = scmp.ne.s32.totalorder %s135, %s136
    %p145 = scmp.eq.s32.totalorder %s20, 0
    %p146 = por %p144, %p145
    %p147 = scmp.ne.s32.totalorder %s135, %s136
    %p148 = scmp.eq.s32.totalorder %s21, 2
    %p149 = por %p147, %p148
    %p151 = scmp.ne.s32.totalorder %s136, %s150
    %p152 = scmp.eq.s32.totalorder %s21, 0
    %p153 = por %p151, %p152
    %s155 = sadd.s32 %s154, 1
    %p158 = scmp.eq.s32.totalorder %s15, 2
    %p159 = scmp.ne.s32.totalorder %s154, %s156
    %p160 = scmp.eq.s32.totalorder %s15, 0
    %p161 = por %p159, %p160
    %p162 = scmp.ne.s32.totalorder %s154, %s156
    %p163 = scmp.eq.s32.totalorder %s20, 2
    %p164 = por %p162, %p163
    %p165 = scmp.ne.s32.totalorder %s156, %s157
    %p166 = scmp.eq.s32.totalorder %s20, 0
    %p167 = por %p165, %p166
    %p168 = scmp.ne.s32.totalorder %s156, %s157
    %p169 = scmp.eq.s32.totalorder %s21, 2
    %p170 = por %p168, %p169
    %p172 = scmp.ne.s32.totalorder %s157, %s171
    %p173 = scmp.eq.s32.totalorder %s21, 0
    %p174 = por %p172, %p173
    %s175 = ssub.s32 %s15, %s22
    %p176 = scmp.eq.s32.totalorder %s175, 0
    %s178 = sadd.s32 %s177, 1
    %s179 = scalar_select %p176, %s177, %s178
    %p182 = pneg %p176
    %p183 = scmp.eq.s32.totalorder %s15, 2
    %p184 = por %p182, %p183
    %p185 = scmp.ne.s32.totalorder %s177, %s180
    %p186 = scmp.eq.s32.totalorder %s15, 0
    %p187 = por %p185, %p186
    %p188 = scmp.ne.s32.totalorder %s177, %s180
    %p189 = scmp.eq.s32.totalorder %s20, 2
    %p190 = por %p188, %p189
    %p191 = scmp.ne.s32.totalorder %s180, %s181
    %p192 = scmp.eq.s32.totalorder %s20, 0
    %p193 = por %p191, %p192
    %p194 = scmp.ne.s32.totalorder %s180, %s181
    %p195 = scmp.eq.s32.totalorder %s21, 2
    %p196 = por %p194, %p195
    %p198 = scmp.ne.s32.totalorder %s181, %s197
    %p199 = scmp.eq.s32.totalorder %s21, 0
    %p200 = por %p198, %p199
    %p201 = scmp.le.s32.totalorder 1, %s15
    %p202 = scmp.lt.s32.totalorder %s15, 4
    %p203 = pnand %p201, %p202
    %p204 = pneg %p203
    // Predicated region
    $region9: #{tpu_custom_call.1} parent=5 // pred_check
      _
    $region10: #{tpu_custom_call.1} parent=5 // pred_check_branch
      %206 = sbr.rel (%p203) target = $region12
    $region11: #{tpu_custom_call.1} parent=5 // pred_region
      %s207 = ssub.s32 %s15, 1
      // Predicated region
      $region13: #{tpu_custom_call.1} parent=11 // pred_check
        %p208 = pneg %p62
      $region14: #{tpu_custom_call.1} parent=11 // pred_check_branch
        %210 = sbr.rel (%p208) target = $region16
      $region15: #{tpu_custom_call.1} parent=11 // pred_region
        _
      $region16: #{tpu_custom_call.1} parent=11 // pred_fallthru
        _
      // Predicated region
      $region17: #{tpu_custom_call.1} parent=11 // pred_check
        %p211 = pneg %p83
      $region18: #{tpu_custom_call.1} parent=11 // pred_check_branch
        %213 = sbr.rel (%p211) target = $region20
      $region19: #{tpu_custom_call.1} parent=11 // pred_region
        _
      $region20: #{tpu_custom_call.1} parent=11 // pred_fallthru
        _
      // Predicated region
      $region21: #{tpu_custom_call.1} parent=11 // pred_check
        %p214 = pneg %p104
      $region22: #{tpu_custom_call.1} parent=11 // pred_check_branch
        %216 = sbr.rel (%p214) target = $region24
      $region23: #{tpu_custom_call.1} parent=11 // pred_region
        _
      $region24: #{tpu_custom_call.1} parent=11 // pred_fallthru
        _
      // Predicated region
      $region25: #{tpu_custom_call.1} parent=11 // pred_check
        %p217 = pneg %p125
      $region26: #{tpu_custom_call.1} parent=11 // pred_check_branch
        %219 = sbr.rel (%p217) target = $region28
      $region27: #{tpu_custom_call.1} parent=11 // pred_region
        _
      $region28: #{tpu_custom_call.1} parent=11 // pred_fallthru
        _
      // Predicated region
      $region29: #{tpu_custom_call.1} parent=11 // pred_check
        %p220 = pneg %p146
      $region30: #{tpu_custom_call.1} parent=11 // pred_check_branch
        %222 = sbr.rel (%p220) target = $region32
      $region31: #{tpu_custom_call.1} parent=11 // pred_region
        _
      $region32: #{tpu_custom_call.1} parent=11 // pred_fallthru
        _
      // Predicated region
      $region33: #{tpu_custom_call.1} parent=11 // pred_check
        %p223 = pneg %p167
      $region34: #{tpu_custom_call.1} parent=11 // pred_check_branch
        %225 = sbr.rel (%p223) target = $region36
      $region35: #{tpu_custom_call.1} parent=11 // pred_region
        _
      $region36: #{tpu_custom_call.1} parent=11 // pred_fallthru
        _
    $region12: #{tpu_custom_call.1} parent=5 // pred_fallthru
      _
    %p226 = scmp.lt.s32.totalorder %s15, 3
    // Predicated region
    $region37: #{tpu_custom_call.1} parent=5 // pred_check
      %p227 = pneg %p226
    $region38: #{tpu_custom_call.1} parent=5 // pred_check_branch
      %229 = sbr.rel (%p227) target = $region40
    $region39: #{tpu_custom_call.1} parent=5 // pred_region
      // Predicated region
      $region41: #{tpu_custom_call.1} parent=39 // pred_check
        %p230 = pneg %p35
      $region42: #{tpu_custom_call.1} parent=39 // pred_check_branch
        %232 = sbr.rel (%p230) target = $region44
      $region43: #{tpu_custom_call.1} parent=39 // pred_region
        %p233 = scmp.lt.s32.totalorder %s15, 2
        %s234 = scalar_select %p233, %s15, 2
        %s235 = smul.addr %s234, 4
        %s236 = scalar_lea.vmem %s0, %s235
      $region44: #{tpu_custom_call.1} parent=39 // pred_fallthru
        _
    $region40: #{tpu_custom_call.1} parent=5 // pred_fallthru
      _
    %p237 = scmp.le.s32.totalorder 1, %s15
    %p238 = scmp.lt.s32.totalorder %s15, 4
    %p239 = pnand %p237, %p238
    %p240 = pneg %p239
    // Predicated region
    $region45: #{tpu_custom_call.1} parent=5 // pred_check
      _
    $region46: #{tpu_custom_call.1} parent=5 // pred_check_branch
      %242 = sbr.rel (%p239) target = $region48
    $region47: #{tpu_custom_call.1} parent=5 // pred_region
      %s243 = ssub.s32 %s15, 1
      %p244 = scmp.lt.s32.totalorder %s20, 2
      %s245 = scalar_select %p244, %s20, 2
      %s246 = smul.addr %s245, 4
      %s247 = scalar_lea.vmem %s0, %s246
      %p248 = pneg %p41
      %p249 = pneg %p38
      %p250 = pneg %p62
      %p251 = pneg %p59
      %p252 = pneg %p83
      %p253 = pneg %p80
      %p254 = pneg %p104
      %p255 = pneg %p101
      %p256 = pneg %p125
      %p257 = pneg %p122
      %p258 = pneg %p146
      %p259 = pneg %p143
      %p260 = pneg %p167
      %p261 = pneg %p164
      %p262 = pneg %p193
      %p263 = pneg %p190
      %p264 = scmp.lt.s32.totalorder %s20, 2
      %s265 = scalar_select %p264, %s20, 2
      %s266 = smul.addr %s265, 8
      %s267 = scalar_lea.vmem %s7, %s266
      %p268 = scmp.lt.s32.totalorder %s20, 2
      %s269 = scalar_select %p268, %s20, 2
      %s270 = smul.addr %s269, 4
      %s271 = scalar_lea.vmem %s0, %s270
      %p272 = scmp.lt.s32.totalorder %s20, 2
      %s273 = scalar_select %p272, %s20, 2
      %s274 = smul.addr %s273, 8
      %s275 = scalar_lea.vmem %s7, %s274
      %v277 = vld [vmem:[%s271] sm:$0xf]
      %v278 = vld [vmem:[%s1] sm:$0xf]
      %v279 = vld [vmem:[%s1 + $0x4] sm:$0xf]
      %v280 = vld [vmem:[%s1 + $0x8] sm:$0xf]
      %v281 = vld [vmem:[%s1 + $0xc] sm:$0xf]
      %v282 = vld [vmem:[%s2] sm:$0x1]
      %v284 = vperm.slane %v282, 0
      %v290 = vunpack.c.l.b16 %v278
      %v291 = vunpack.c.l.b16 %v279
      %v292 = vunpack.c.l.b16 %v280
      %v293 = vunpack.c.l.b16 %v281
      %v294 = vpack.c.b16 %v291, %v290
      %v295 = vpack.c.b16 %v293, %v292
      %vm298 = vcmask 261120
      %v300 = vsel %vm298, %v277, 0
      %302 = vmatpush.bf16.msra.mxu0 0
      %303 = vmatpush.bf16.msra.mxu0 0
      %304 = vmatpush.bf16.msra.mxu0 0
      %305 = vmatpush.bf16.msra.mxu0 0
      %306 = vmatpush.bf16.msra.mxu0 0
      %307 = vmatpush.bf16.msra.mxu0 0
      %308 = vmatpush.bf16.msra.mxu0 %v295
      %309 = vmatpush.bf16.msra.mxu0 %v294
      %310 = vmatmul.bf16.gmra.mxu0 %v300
      %v311 = vpop.f32.mrf.mxu0
      %v312 = vadd.f32 %v284, %v311
      %v313 = vpop.f32.mrf.mxu0
      %314 = vdwg.mxu0
      %v315 = vmax.f32 %v312, 0.0
      %v316 = vld [vmem:[%s3] sm:$0xff]
      %v317 = vld [vmem:[%s3 + $0x8] sm:$0xff]
      %v318 = vld [vmem:[%s3 + $0x10] sm:$0xff]
      %v319 = vld [vmem:[%s3 + $0x18] sm:$0xff]
      %v320 = vld [vmem:[%s4] sm:$0x1]
      %v322 = vperm.slane %v320, 0
      %v325 = vsel %vm298, %v315, 0
      %327 = vmatpush.msra.mxu0 0.0
      %328 = vmatpush.msra.mxu0 0.0
      %329 = vmatpush.msra.mxu0 0.0
      %330 = vmatpush.msra.mxu0 0.0
      %331 = vmatpush.msra.mxu0 0.0
      %332 = vmatpush.msra.mxu0 0.0
      %333 = vmatpush.msra.mxu0 0.0
      %334 = vmatpush.msra.mxu0 0.0
      %335 = vmatpush.msra.mxu0 0.0
      %336 = vmatpush.msra.mxu0 0.0
      %337 = vmatpush.msra.mxu0 0.0
      %338 = vmatpush.msra.mxu0 0.0
      %339 = vmatpush.msra.mxu0 %v319
      %340 = vmatpush.msra.mxu0 %v318
      %341 = vmatpush.msra.mxu0 %v317
      %342 = vmatpush.msra.mxu0 %v316
      %343 = vmatmul.f32.gmra.mxu0 %v325
      %v344 = vpop.f32.mrf.mxu0
      %v345 = vadd.f32 %v322, %v344
      %346 = vdwg.mxu0
      %v347 = vmax.f32 %v345, 0.0
      %v348 = vld [vmem:[%s5] sm:$0x1]
      %v350 = vperm.slane %v348, 0
      %v352 = vmul.f32 %v347, %v350
      %vm353 = vcmask 130048
      %v354 = vsel %vm353, %v352, 0.0
      %355 = vadd.xlane.f32.xlu0 %v354
      %v356 = vpop.xlane.xlu0 %355
      %v357 = vld [vmem:[#allocation2] sm:$0x1]
      %v359 = vperm.slane %v357, 0
      %v361 = vadd.f32 %v356, %v359
      %v362 = vxor.u32 %v361, 2147483648
      %v363 = vmul.f32 %v362, 1.442695
      %v364 = vpow.pop %v363
      %v365 = vadd.f32 %v364, 1.0
      %v366 = vrcp.pop %v365
      %v367 = vmul.f32 %v365, %v366
      %v368 = vsub.f32 1.0, %v367
      %v369 = vmul.f32 %v366, %v368
      %v370 = vadd.f32 %v366, %v369
      %vm371 = vweird.f32 %v365
      %vm372 = vweird.f32 %v366
      %vm373 = vmor %vm371, %vm372
      %v374 = vsel %vm373, %v366, %v370
      %v375 = vand.u32 2147483647, %v365
      %vm376 = vcmp.eq.f32.partialorder %v375, 8.507059e+37
      %v377 = vand.u32 %v365, 2147483648
      %v378 = vor.u32 1.1754944e-38, %v377
      %v379 = vsel %vm376, %v378, %v374
      %v380 = vmul.f32 1.0, %v379
      %vm381 = vcmask 7168
      %382 = vst.msk [vmem:[%s275] sm:$0xff] %vm381, %v380
      %p383 = scmp.lt.s32.totalorder %s20, 2
      %s384 = scalar_select %p383, %s20, 2
      %s385 = smul.addr %s384, 8
      %s386 = scalar_lea.vmem %s7, %s385
      // Predicated region
      $region49: #{tpu_custom_call.1} parent=47 // pred_check
        %p387 = pneg %p190
      $region50: #{tpu_custom_call.1} parent=47 // pred_check_branch
        %389 = sbr.rel (%p387) target = $region52
      $region51: #{tpu_custom_call.1} parent=47 // pred_region
        _
      $region52: #{tpu_custom_call.1} parent=47 // pred_fallthru
        _
    $region48: #{tpu_custom_call.1} parent=5 // pred_fallthru
      _
    %p390 = scmp.le.s32.totalorder 2, %s15
    // Predicated region
    $region53: #{tpu_custom_call.1} parent=5 // pred_check
      %p391 = pneg %p390
    $region54: #{tpu_custom_call.1} parent=5 // pred_check_branch
      %393 = sbr.rel (%p391) target = $region56
    $region55: #{tpu_custom_call.1} parent=5 // pred_region
      %s394 = ssub.s32 %s15, 2
      // Predicated region
      $region57: #{tpu_custom_call.1} parent=55 // pred_check
        %p395 = pneg %p196
      $region58: #{tpu_custom_call.1} parent=55 // pred_check_branch
        %397 = sbr.rel (%p395) target = $region60
      $region59: #{tpu_custom_call.1} parent=55 // pred_region
        %p398 = scmp.lt.s32.totalorder %s21, 2
        %s399 = scalar_select %p398, %s21, 2
        %s400 = smul.addr %s399, 8
        %s401 = scalar_lea.vmem %s7, %s400
      $region60: #{tpu_custom_call.1} parent=55 // pred_fallthru
        _
    $region56: #{tpu_custom_call.1} parent=5 // pred_fallthru
      _
  $region6: #{tpu_custom_call.1} parent=0 // loop_footer
    %s19 = sadd.s32 1, %s15
  $region7: #{tpu_custom_call.1} parent=0 // loop_footer_branch
    %14 = sbr.rel target = $region3
  $region8: #{tpu_custom_call.1} parent=0 // loop_exit
    _

</llo_original>
